<compile_context>
chip_gen: v7x
topology: tpu7x:2x2x1
jax: 0.10.0
libtpu: 0.0.40
codegen_flags: <defaults>
</compile_context>

<pallas_src>
import functools

import jax
import jax.numpy as jnp
from jax.experimental import pallas as pl
from jax.experimental.pallas import tpu as pltpu


def _se_kernel(x_ref, w1t_ref, b1_ref, w2t_ref, b2_ref, o_ref, *, inv_hw):
    # x_ref: (Bt, C, HW) in the input's native dtype.
    x = x_ref[...]
    # Squeeze: global average pool per (batch, channel); f32 accumulation with
    # an explicit 1/HW scale (robust even if HW were ever padded).
    pooled = jnp.sum(x, axis=-1, dtype=jnp.float32) * inv_hw          # (Bt, C)
    # Excite: row-vector FCs against pre-transposed weights, f32 accumulate.
    h = jnp.dot(pooled, w1t_ref[...],
                preferred_element_type=jnp.float32) + b1_ref[...]     # (Bt, Cr)
    h = jnp.maximum(h, 0.0)
    y = jnp.dot(h, w2t_ref[...],
                preferred_element_type=jnp.float32) + b2_ref[...]     # (Bt, C)
    y = jax.nn.sigmoid(y)
    # Rescale in native dtype (no f32 copy of the big tile).
    o_ref[...] = x * y.astype(x.dtype)[:, :, None]


def _pick_batch_tile(batch, bytes_per_batch,
                     target_block_bytes=2 << 20, min_split_bytes=512 << 10):
    """Pick Bt (a divisor of `batch`) for the (Bt, C, HW) block."""
    divisors = [d for d in range(1, batch + 1) if batch % d == 0]
    fitting = [d for d in divisors if d * bytes_per_batch <= target_block_bytes]
    bt = max(fitting) if fitting else 1   # biggest block -> amortize step cost
    if batch // bt < 2 and batch >= 2:
        # Keep >= 2 grid steps so v7x's two TensorCores both get work, but only
        # if the split blocks are still big enough to amortize per-step cost.
        half = max(d for d in divisors if d <= batch // 2)
        if half * bytes_per_batch >= min_split_bytes:
            bt = half
    return bt


def se_layer(x, w1, b1, w2, b2):
    """x: (B, C, H, W); w1: (Cr, C); b1: (Cr,); w2: (C, Cr); b2: (C,)."""
    B, C, H, W = x.shape
    HW = H * W
    Cr = w1.shape[0]

    x3 = x.reshape(B, C, HW)          # free: contiguous flatten of (H, W)
    w1t = w1.T                        # (C, Cr)  row-vector FC layout
    w2t = w2.T                        # (Cr, C)
    b1r = b1.reshape(1, Cr)
    b2r = b2.reshape(1, C)

    bytes_per_batch = C * HW * x.dtype.itemsize
    Bt = _pick_batch_tile(B, bytes_per_batch)
    grid = (B // Bt,)
    block_bytes = Bt * bytes_per_batch

    kernel = functools.partial(_se_kernel, inv_hw=1.0 / HW)

    # in + out blocks, double-buffered, plus tiny weights and slack.
    vmem_needed = 4 * block_bytes + 4 * (w1.size + w2.size + C + Cr) + (1 << 20)
    compiler_kwargs = dict(dimension_semantics=("parallel",))
    if vmem_needed > (16 << 20):      # beyond the most conservative (v5e) default
        # Cap so the request also stays valid on v7x (64 MiB physical VMEM);
        # v6e (128 MiB physical) could go higher for huge feature maps.
        compiler_kwargs["vmem_limit_bytes"] = int(min(vmem_needed, 60 << 20))

    out = pl.pallas_call(
        kernel,
        out_shape=jax.ShapeDtypeStruct((B, C, HW), x.dtype),
        grid_spec=pltpu.PrefetchScalarGridSpec(
            num_scalar_prefetch=0,
            grid=grid,
            in_specs=[
                pl.BlockSpec((Bt, C, HW), lambda i: (i, 0, 0)),
                pl.BlockSpec((C, Cr), lambda i: (0, 0)),
                pl.BlockSpec((1, Cr), lambda i: (0, 0)),
                pl.BlockSpec((Cr, C), lambda i: (0, 0)),
                pl.BlockSpec((1, C), lambda i: (0, 0)),
            ],
            out_specs=pl.BlockSpec((Bt, C, HW), lambda i: (i, 0, 0)),
        ),
        compiler_params=pltpu.CompilerParams(**compiler_kwargs),
    )(x3, w1t, b1r, w2t, b2r)
    return out.reshape(B, C, H, W)


def se_layer_ref(x, w1, b1, w2, b2):
    # pure-JAX reference matching the PyTorch forward
    b, c, _, _ = x.shape
    y = jnp.mean(x.astype(jnp.float32), axis=(2, 3))          # (b, c)
    y = jnp.maximum(y @ w1.T + b1, 0.0)                       # (b, c//r)
    y = jax.nn.sigmoid(y @ w2.T + b2)                         # (b, c)
    return (x * y[:, :, None, None]).astype(x.dtype)


if __name__ == "__main__":
    B, C, H, W = 2, 64, 8, 8
    reduction = 16
    Cr = C // reduction

    key = jax.random.PRNGKey(0)
    kx, k1, k2, k3, k4 = jax.random.split(key, 5)

    x = jax.random.normal(kx, (B, C, H, W), dtype=jnp.float32)

    # deterministic synthetic params (PyTorch-Linear shapes)
    bound1 = 1.0 / (C ** 0.5)
    bound2 = 1.0 / (Cr ** 0.5)
    w1 = jax.random.uniform(k1, (Cr, C), jnp.float32, -bound1, bound1)
    b1 = jax.random.uniform(k2, (Cr,), jnp.float32, -bound1, bound1)
    w2 = jax.random.uniform(k3, (C, Cr), jnp.float32, -bound2, bound2)
    b2 = jax.random.uniform(k4, (C,), jnp.float32, -bound2, bound2)

    out = se_layer(x, w1, b1, w2, b2)
    out = jax.block_until_ready(out)

    ref = se_layer_ref(x, w1, b1, w2, b2)
    assert out.shape == (B, C, H, W)
    assert jnp.allclose(out, ref, atol=1e-5, rtol=1e-5)

    print("KERNEL_OK")
</pallas_src>

<mosaic_0001>
module attributes {stable_mosaic.version = 11 : i64} {
  func.func @_se_kernel(%arg0: i32, %arg1: memref<2x64x64xf32, #tpu.memory_space<vmem>>, %arg2: memref<64x4xf32, #tpu.memory_space<vmem>>, %arg3: memref<1x4xf32, #tpu.memory_space<vmem>>, %arg4: memref<4x64xf32, #tpu.memory_space<vmem>>, %arg5: memref<1x64xf32, #tpu.memory_space<vmem>>, %arg6: memref<2x64x64xf32, #tpu.memory_space<vmem>>) attributes {dimension_semantics = [#tpu.dimension_semantics<parallel>], iteration_bounds = array<i64: 1>, scalar_prefetch = 0 : i64, scratch_operands = 0 : i64, tpu.core_type = #tpu.core_type<tc>, window_params = [{transform_indices = @transform_0, window_bounds = array<i64: 2, 64, 64>}, {pipeline_mode = #tpu.pipeline_mode<synchronous>, transform_indices = @transform_1, window_bounds = array<i64: 64, 4>}, {pipeline_mode = #tpu.pipeline_mode<synchronous>, transform_indices = @transform_2, window_bounds = array<i64: 1, 4>}, {pipeline_mode = #tpu.pipeline_mode<synchronous>, transform_indices = @transform_3, window_bounds = array<i64: 4, 64>}, {pipeline_mode = #tpu.pipeline_mode<synchronous>, transform_indices = @transform_4, window_bounds = array<i64: 1, 64>}, {transform_indices = @transform_5, window_bounds = array<i64: 2, 64, 64>}]} {
    %c0 = arith.constant 0 : index
    %c0_0 = arith.constant 0 : index
    %c0_1 = arith.constant 0 : index
    %0 = vector.load %arg1[%c0, %c0_0, %c0_1] : memref<2x64x64xf32, #tpu.memory_space<vmem>>, vector<2x64x64xf32>
    %cst = arith.constant dense<0.000000e+00> : vector<2x64xf32>
    %1 = vector.multi_reduction <add>, %0, %cst [2] : vector<2x64x64xf32> to vector<2x64xf32>
    %cst_2 = arith.constant 1.562500e-02 : f32
    %2 = vector.broadcast %cst_2 : f32 to vector<2x64xf32>
    %3 = arith.mulf %1, %2 : vector<2x64xf32>
    %c0_3 = arith.constant 0 : index
    %c0_4 = arith.constant 0 : index
    %4 = vector.load %arg2[%c0_3, %c0_4] : memref<64x4xf32, #tpu.memory_space<vmem>>, vector<64x4xf32>
    %cst_5 = arith.constant dense<0.000000e+00> : vector<2x4xf32>
    %5 = tpu.matmul %3, %4, %cst_5 {dimension_numbers = #tpu.dot_dimension_numbers<[1], [0], [0], [1], [0, 0, 1, 1], [], []>} : vector<2x64xf32>, vector<64x4xf32>, vector<2x4xf32> -> vector<2x4xf32>
    %c0_6 = arith.constant 0 : index
    %c0_7 = arith.constant 0 : index
    %6 = vector.load %arg3[%c0_6, %c0_7] : memref<1x4xf32, #tpu.memory_space<vmem>>, vector<1x4xf32>
    %7 = vector.broadcast %6 : vector<1x4xf32> to vector<2x4xf32>
    %8 = arith.addf %5, %7 : vector<2x4xf32>
    %cst_8 = arith.constant 0.000000e+00 : f32
    %9 = vector.broadcast %cst_8 : f32 to vector<2x4xf32>
    %10 = arith.maximumf %8, %9 : vector<2x4xf32>
    %c0_9 = arith.constant 0 : index
    %c0_10 = arith.constant 0 : index
    %11 = vector.load %arg4[%c0_9, %c0_10] : memref<4x64xf32, #tpu.memory_space<vmem>>, vector<4x64xf32>
    %cst_11 = arith.constant dense<0.000000e+00> : vector<2x64xf32>
    %12 = tpu.matmul %10, %11, %cst_11 {dimension_numbers = #tpu.dot_dimension_numbers<[1], [0], [0], [1], [0, 0, 1, 1], [], []>} : vector<2x4xf32>, vector<4x64xf32>, vector<2x64xf32> -> vector<2x64xf32>
    %c0_12 = arith.constant 0 : index
    %c0_13 = arith.constant 0 : index
    %13 = vector.load %arg5[%c0_12, %c0_13] : memref<1x64xf32, #tpu.memory_space<vmem>>, vector<1x64xf32>
    %14 = vector.broadcast %13 : vector<1x64xf32> to vector<2x64xf32>
    %15 = arith.addf %12, %14 : vector<2x64xf32>
    %16 = arith.negf %15 : vector<2x64xf32>
    %17 = math.exp %16 : vector<2x64xf32>
    %cst_14 = arith.constant 1.000000e+00 : f32
    %18 = vector.broadcast %cst_14 : f32 to vector<2x64xf32>
    %19 = arith.addf %18, %17 : vector<2x64xf32>
    %20 = arith.divf %18, %19 : vector<2x64xf32>
    %21 = vector.shape_cast %20 : vector<2x64xf32> to vector<2x64x1xf32>
    %22 = vector.broadcast %21 : vector<2x64x1xf32> to vector<2x64x64xf32>
    %23 = arith.mulf %0, %22 : vector<2x64x64xf32>
    %c0_15 = arith.constant 0 : index
    %c0_16 = arith.constant 0 : index
    %c0_17 = arith.constant 0 : index
    %24 = vector.load %arg6[%c0_15, %c0_16, %c0_17] : memref<2x64x64xf32, #tpu.memory_space<vmem>>, vector<2x64x64xf32>
    tpu.vector_store %arg6[%c0_15, %c0_16, %c0_17], %23 {strides = array<i32>} : memref<2x64x64xf32, #tpu.memory_space<vmem>>, vector<2x64x64xf32>,
    return
  }
  func.func @transform_0(%arg0: i32) -> (i32, i32, i32) {
    %c0_i32 = arith.constant 0 : i32
    %c0_i32_0 = arith.constant 0 : i32
    %c0_i32_1 = arith.constant 0 : i32
    return %arg0, %c0_i32, %c0_i32_0 : i32, i32, i32
  }
  func.func @transform_1(%arg0: i32) -> (i32, i32) {
    %c0_i32 = arith.constant 0 : i32
    %c0_i32_0 = arith.constant 0 : i32
    %c0_i32_1 = arith.constant 0 : i32
    return %c0_i32, %c0_i32_0 : i32, i32
  }
  func.func @transform_2(%arg0: i32) -> (i32, i32) {
    %c0_i32 = arith.constant 0 : i32
    %c0_i32_0 = arith.constant 0 : i32
    %c0_i32_1 = arith.constant 0 : i32
    return %c0_i32, %c0_i32_0 : i32, i32
  }
  func.func @transform_3(%arg0: i32) -> (i32, i32) {
    %c0_i32 = arith.constant 0 : i32
    %c0_i32_0 = arith.constant 0 : i32
    %c0_i32_1 = arith.constant 0 : i32
    return %c0_i32, %c0_i32_0 : i32, i32
  }
  func.func @transform_4(%arg0: i32) -> (i32, i32) {
    %c0_i32 = arith.constant 0 : i32
    %c0_i32_0 = arith.constant 0 : i32
    %c0_i32_1 = arith.constant 0 : i32
    return %c0_i32, %c0_i32_0 : i32, i32
  }
  func.func @transform_5(%arg0: i32) -> (i32, i32, i32) {
    %c0_i32 = arith.constant 0 : i32
    %c0_i32_0 = arith.constant 0 : i32
    %c0_i32_1 = arith.constant 0 : i32
    return %arg0, %c0_i32, %c0_i32_0 : i32, i32, i32
  }
}

</mosaic_0001>

<llo_original>
// kernel: tpu_custom_call.1
$region0: #{tpu_custom_call.1}
  #allocation0 [shape = 'u32[]', space=smem, size = 0x4, offset = 0x4, fixed_abs, tag = 'smem constant byte address 0x4 - core index']
  #allocation1 [shape = 'u32[144,128]{1,0:T(1,128)}', space=vmem, size = 0x12000, scoped, tag = 'internal scratch']
  %s0 = inlined_call_operand.hbm [shape: f32[2,64,64], index: 0, kind: input, shape index: {}]
  %s1 = inlined_call_operand.vmem [shape: f32[64,4], index: 1, kind: input, shape index: {}]
  %s2 = inlined_call_operand.vmem [shape: f32[1,4], index: 2, kind: input, shape index: {}]
  %s3 = inlined_call_operand.vmem [shape: f32[4,64], index: 3, kind: input, shape index: {}]
  %s4 = inlined_call_operand.vmem [shape: f32[1,64], index: 4, kind: input, shape index: {}]
  %s5 = inlined_call_operand.hbm [shape: f32[2,64,64], index: 5, kind: output, shape index: {}]
  %s6 = sld [smem:[#allocation0]]
  $region34: #{tpu_custom_call.1} parent=0
    _
  %s8 = ssub.s32 1, %s6
  %s9 = scalar_select 0, %s8, %s6
  $region1: #{tpu_custom_call.1} parent=0
    #allocation2 [shape = 'u8[65536]{0}', space=vmem, size = 0x10000, scoped, tag = 'input window, operand 0, single buffered']
    #allocation3 [shape = 's32[1]{0}', space=sflag, size = 0x4, scoped, tag = 'scoped memory for tpu_custom_call.1']
    #allocation4 [shape = 's32[1]{0}', space=sflag, size = 0x4, scoped, tag = 'scoped memory for tpu_custom_call.1']
    #allocation5 [shape = 'u8[65536]{0}', space=vmem, size = 0x10000, scoped, tag = 'output window, operand 0, single buffered']
    %10 = vsyncpa [#allocation3], 0
    %11 = vsyncpa [#allocation4], 0
    // Predicated region
    $region2: #{tpu_custom_call.1} parent=1 // pred_check
      _
    $region3: #{tpu_custom_call.1} parent=1 // pred_check_branch
      %13 = sbr.rel (0) target = $region5
    $region4: #{tpu_custom_call.1} parent=1 // pred_region
      %s15 = ssub.s32 2048, 2048
      %16 = vsyncadd [#allocation3], %s15
      %s17 = sshll.u32 [#allocation2], 4
      %s18 = int_to_ptr.vmem [resolvable:$true] %s17
      %23 = dma.hbm_to_vmem [thread:$0]  %s0, 2048, %s18, [#allocation3], 128, 128, 8
    $region5: #{tpu_custom_call.1} parent=1 // pred_fallthru
      _
    // Predicated region
    $region6: #{tpu_custom_call.1} parent=1 // pred_check
      _
    $region7: #{tpu_custom_call.1} parent=1 // pred_check_branch
      %25 = sbr.rel (0) target = $region9
    $region8: #{tpu_custom_call.1} parent=1 // pred_region
      _
    $region9: #{tpu_custom_call.1} parent=1 // pred_fallthru
      _
    // Predicated region
    $region10: #{tpu_custom_call.1} parent=1 // pred_check
      _
    $region11: #{tpu_custom_call.1} parent=1 // pred_check_branch
      %27 = sbr.rel (0) target = $region13
    $region12: #{tpu_custom_call.1} parent=1 // pred_region
      _
    $region13: #{tpu_custom_call.1} parent=1 // pred_fallthru
      _
    // Predicated region
    $region14: #{tpu_custom_call.1} parent=1 // pred_check
      _
    $region15: #{tpu_custom_call.1} parent=1 // pred_check_branch
      %29 = sbr.rel (0) target = $region17
    $region16: #{tpu_custom_call.1} parent=1 // pred_region
      _
    $region17: #{tpu_custom_call.1} parent=1 // pred_fallthru
      _
    // Predicated region
    $region18: #{tpu_custom_call.1} parent=1 // pred_check
      _
    $region19: #{tpu_custom_call.1} parent=1 // pred_check_branch
      %31 = sbr.rel (0) target = $region21
    $region20: #{tpu_custom_call.1} parent=1 // pred_region
      _
    $region21: #{tpu_custom_call.1} parent=1 // pred_fallthru
      _
    // Predicated region
    $region22: #{tpu_custom_call.1} parent=1 // pred_check
      _
    $region23: #{tpu_custom_call.1} parent=1 // pred_check_branch
      %33 = sbr.rel (0) target = $region25
    $region24: #{tpu_custom_call.1} parent=1 // pred_region
      %34 = dma.done [#allocation3], 2048
    $region25: #{tpu_custom_call.1} parent=1 // pred_fallthru
      _
    %v35 = vld [vmem:[#allocation2] sm:$0xff]
    %v36 = vld [vmem:[#allocation2 + $0x8] sm:$0xff]
    %v37 = vld [vmem:[#allocation2 + $0x10] sm:$0xff]
    %v38 = vld [vmem:[#allocation2 + $0x18] sm:$0xff]
    %v39 = vld [vmem:[#allocation2 + $0x20] sm:$0xff]
    %v40 = vld [vmem:[#allocation2 + $0x28] sm:$0xff]
    %v41 = vld [vmem:[#allocation2 + $0x30] sm:$0xff]
    %v42 = vld [vmem:[#allocation2 + $0x38] sm:$0xff]
    %v43 = vld [vmem:[#allocation2 + $0x40] sm:$0xff]
    %v44 = vld [vmem:[#allocation2 + $0x48] sm:$0xff]
    %v45 = vld [vmem:[#allocation2 + $0x50] sm:$0xff]
    %v46 = vld [vmem:[#allocation2 + $0x58] sm:$0xff]
    %v47 = vld [vmem:[#allocation2 + $0x60] sm:$0xff]
    %v48 = vld [vmem:[#allocation2 + $0x68] sm:$0xff]
    %v49 = vld [vmem:[#allocation2 + $0x70] sm:$0xff]
    %v50 = vld [vmem:[#allocation2 + $0x78] sm:$0xff]
    %vm51 = vcmask 523264
    %v52 = vsel %vm51, %v35, 0.0
    %53 = vadd.xlane.f32.xlu0 %v52
    %v54 = vpop.xlane.xlu0 %53
    %v55 = vsel %vm51, %v36, 0.0
    %56 = vadd.xlane.f32.xlu0 %v55
    %v57 = vpop.xlane.xlu0 %56
    %v58 = vsel %vm51, %v37, 0.0
    %59 = vadd.xlane.f32.xlu0 %v58
    %v60 = vpop.xlane.xlu0 %59
    %v61 = vsel %vm51, %v38, 0.0
    %62 = vadd.xlane.f32.xlu0 %v61
    %v63 = vpop.xlane.xlu0 %62
    %v64 = vsel %vm51, %v39, 0.0
    %65 = vadd.xlane.f32.xlu0 %v64
    %v66 = vpop.xlane.xlu0 %65
    %v67 = vsel %vm51, %v40, 0.0
    %68 = vadd.xlane.f32.xlu0 %v67
    %v69 = vpop.xlane.xlu0 %68
    %v70 = vsel %vm51, %v41, 0.0
    %71 = vadd.xlane.f32.xlu0 %v70
    %v72 = vpop.xlane.xlu0 %71
    %v73 = vsel %vm51, %v42, 0.0
    %74 = vadd.xlane.f32.xlu0 %v73
    %v75 = vpop.xlane.xlu0 %74
    %v76 = vsel %vm51, %v43, 0.0
    %77 = vadd.xlane.f32.xlu0 %v76
    %v78 = vpop.xlane.xlu0 %77
    %v79 = vsel %vm51, %v44, 0.0
    %80 = vadd.xlane.f32.xlu0 %v79
    %v81 = vpop.xlane.xlu0 %80
    %v82 = vsel %vm51, %v45, 0.0
    %83 = vadd.xlane.f32.xlu0 %v82
    %v84 = vpop.xlane.xlu0 %83
    %v85 = vsel %vm51, %v46, 0.0
    %86 = vadd.xlane.f32.xlu0 %v85
    %v87 = vpop.xlane.xlu0 %86
    %v88 = vsel %vm51, %v47, 0.0
    %89 = vadd.xlane.f32.xlu0 %v88
    %v90 = vpop.xlane.xlu0 %89
    %v91 = vsel %vm51, %v48, 0.0
    %92 = vadd.xlane.f32.xlu0 %v91
    %v93 = vpop.xlane.xlu0 %92
    %v94 = vsel %vm51, %v49, 0.0
    %95 = vadd.xlane.f32.xlu0 %v94
    %v96 = vpop.xlane.xlu0 %95
    %v97 = vsel %vm51, %v50, 0.0
    %98 = vadd.xlane.f32.xlu0 %v97
    %v99 = vpop.xlane.xlu0 %98
    %v100 = vmul.f32 %v54, 0.015625
    %v101 = vmul.f32 %v57, 0.015625
    %v102 = vmul.f32 %v60, 0.015625
    %v103 = vmul.f32 %v63, 0.015625
    %v104 = vmul.f32 %v66, 0.015625
    %v105 = vmul.f32 %v69, 0.015625
    %v106 = vmul.f32 %v72, 0.015625
    %v107 = vmul.f32 %v75, 0.015625
    %v108 = vmul.f32 %v78, 0.015625
    %v109 = vmul.f32 %v81, 0.015625
    %v110 = vmul.f32 %v84, 0.015625
    %v111 = vmul.f32 %v87, 0.015625
    %v112 = vmul.f32 %v90, 0.015625
    %v113 = vmul.f32 %v93, 0.015625
    %v114 = vmul.f32 %v96, 0.015625
    %v115 = vmul.f32 %v99, 0.015625
    %v116 = vld [vmem:[%s1] sm:$0xff]
    %v117 = vld [vmem:[%s1 + $0x8] sm:$0xff]
    %v118 = vld [vmem:[%s1 + $0x10] sm:$0xff]
    %v119 = vld [vmem:[%s1 + $0x18] sm:$0xff]
    %v120 = vld [vmem:[%s1 + $0x20] sm:$0xff]
    %v121 = vld [vmem:[%s1 + $0x28] sm:$0xff]
    %v122 = vld [vmem:[%s1 + $0x30] sm:$0xff]
    %v123 = vld [vmem:[%s1 + $0x38] sm:$0xff]
    %v124 = vld [vmem:[%s2] sm:$0x1]
    %v126 = vlaneseq
    %v127 = vshrl.u32 %v126, 7
    %v128 = vsub.s32 0, %v127
    %v129 = vrot.slane %v124, %v128
    %v147 = vlaneseq
    %v148 = vand.u32 %v147, 127
    %v149 = vlaneseq
    %v150 = vshrl.u32 %v149, 7
    %v151 = vsub.s32 %v148, %v150
    %v152 = vrot.slane %v100, %v151
    %v153 = vadd.s32 %v148, 4294967288
    %v154 = vlaneseq
    %v155 = vshrl.u32 %v154, 7
    %v156 = vsub.s32 %v153, %v155
    %v157 = vrot.slane %v101, %v156
    %vm158 = vcmask 130112
    %v159 = vsel %vm158, %v157, %v152
    %v160 = vadd.s32 %v148, 4294967280
    %v161 = vlaneseq
    %v162 = vshrl.u32 %v161, 7
    %v163 = vsub.s32 %v160, %v162
    %v164 = vrot.slane %v102, %v163
    %vm165 = vcmask 195712
    %v166 = vsel %vm165, %v164, %v159
    %v167 = vadd.s32 %v148, 4294967272
    %v168 = vlaneseq
    %v169 = vshrl.u32 %v168, 7
    %v170 = vsub.s32 %v167, %v169
    %v171 = vrot.slane %v103, %v170
    %vm172 = vcmask 261312
    %v173 = vsel %vm172, %v171, %v166
    %v174 = vadd.s32 %v148, 4294967264
    %v175 = vlaneseq
    %v176 = vshrl.u32 %v175, 7
    %v177 = vsub.s32 %v174, %v176
    %v178 = vrot.slane %v104, %v177
    %vm179 = vcmask 326912
    %v180 = vsel %vm179, %v178, %v173
    %v181 = vadd.s32 %v148, 4294967256
    %v182 = vlaneseq
    %v183 = vshrl.u32 %v182, 7
    %v184 = vsub.s32 %v181, %v183
    %v185 = vrot.slane %v105, %v184
    %vm186 = vcmask 392512
    %v187 = vsel %vm186, %v185, %v180
    %v188 = vadd.s32 %v148, 4294967248
    %v189 = vlaneseq
    %v190 = vshrl.u32 %v189, 7
    %v191 = vsub.s32 %v188, %v190
    %v192 = vrot.slane %v106, %v191
    %vm193 = vcmask 458112
    %v194 = vsel %vm193, %v192, %v187
    %v195 = vadd.s32 %v148, 4294967240
    %v196 = vlaneseq
    %v197 = vshrl.u32 %v196, 7
    %v198 = vsub.s32 %v195, %v197
    %v199 = vrot.slane %v107, %v198
    %vm200 = vcmask 523712
    %v201 = vsel %vm200, %v199, %v194
    %v202 = vlaneseq
    %v203 = vshrl.u32 %v202, 7
    %v204 = vsub.s32 %v148, %v203
    %v205 = vrot.slane %v108, %v204
    %v206 = vlaneseq
    %v207 = vshrl.u32 %v206, 7
    %v208 = vsub.s32 %v153, %v207
    %v209 = vrot.slane %v109, %v208
    %v210 = vsel %vm158, %v209, %v205
    %v211 = vlaneseq
    %v212 = vshrl.u32 %v211, 7
    %v213 = vsub.s32 %v160, %v212
    %v214 = vrot.slane %v110, %v213
    %v215 = vsel %vm165, %v214, %v210
    %v216 = vlaneseq
    %v217 = vshrl.u32 %v216, 7
    %v218 = vsub.s32 %v167, %v217
    %v219 = vrot.slane %v111, %v218
    %v220 = vsel %vm172, %v219, %v215
    %v221 = vlaneseq
    %v222 = vshrl.u32 %v221, 7
    %v223 = vsub.s32 %v174, %v222
    %v224 = vrot.slane %v112, %v223
    %v225 = vsel %vm179, %v224, %v220
    %v226 = vlaneseq
    %v227 = vshrl.u32 %v226, 7
    %v228 = vsub.s32 %v181, %v227
    %v229 = vrot.slane %v113, %v228
    %v230 = vsel %vm186, %v229, %v225
    %v231 = vlaneseq
    %v232 = vshrl.u32 %v231, 7
    %v233 = vsub.s32 %v188, %v232
    %v234 = vrot.slane %v114, %v233
    %v235 = vsel %vm193, %v234, %v230
    %v236 = vlaneseq
    %v237 = vshrl.u32 %v236, 7
    %v238 = vsub.s32 %v195, %v237
    %v239 = vrot.slane %v115, %v238
    %v240 = vsel %vm200, %v239, %v235
    %vm241 = vcmask 1041409
    %v242 = vsel %vm241, %v240, %v201
    %v243 = vsel %vm51, %v242, 0
    %245 = vmatprep.subr.mxu0 0.0
    %246 = vmatpush1.msra.mxu0 %v116
    %247 = vmatprep.subr.mxu0 0.0
    %248 = vmatpush1.msra.mxu0 %v117
    %249 = vmatprep.subr.mxu0 0.0
    %250 = vmatpush1.msra.mxu0 %v118
    %251 = vmatprep.subr.mxu0 0.0
    %252 = vmatpush1.msra.mxu0 %v119
    %253 = vmatprep.subr.mxu0 0.0
    %254 = vmatpush1.msra.mxu0 %v120
    %255 = vmatprep.subr.mxu0 0.0
    %256 = vmatpush1.msra.mxu0 %v121
    %257 = vmatprep.subr.mxu0 0.0
    %258 = vmatpush1.msra.mxu0 %v122
    %259 = vmatprep.subr.mxu0 0.0
    %260 = vmatpush1.msra.mxu0 %v123
    %261 = vmatprep.subr.mxu0 0.0
    %262 = vmatpush1.msra.mxu0 0.0
    %263 = vmatprep.subr.mxu0 0.0
    %264 = vmatpush1.msra.mxu0 0.0
    %265 = vmatprep.subr.mxu0 0.0
    %266 = vmatpush1.msra.mxu0 0.0
    %267 = vmatprep.subr.mxu0 0.0
    %268 = vmatpush1.msra.mxu0 0.0
    %269 = vmatprep.subr.mxu0 0.0
    %270 = vmatpush1.msra.mxu0 0.0
    %271 = vmatprep.subr.mxu0 0.0
    %272 = vmatpush1.msra.mxu0 0.0
    %273 = vmatprep.subr.mxu0 0.0
    %274 = vmatpush1.msra.mxu0 0.0
    %275 = vmatprep.subr.mxu0 0.0
    %276 = vmatpush1.msra.mxu0 0.0
    %277 = vmatprep.subr.mxu0 0.0
    %278 = vmatpush1.msra.mxu0 0.0
    %279 = vmatprep.subr.mxu0 0.0
    %280 = vmatpush1.msra.mxu0 0.0
    %281 = vmatprep.subr.mxu0 0.0
    %282 = vmatpush1.msra.mxu0 0.0
    %283 = vmatprep.subr.mxu0 0.0
    %284 = vmatpush1.msra.mxu0 0.0
    %285 = vmatprep.subr.mxu0 0.0
    %286 = vmatpush1.msra.mxu0 0.0
    %287 = vmatprep.subr.mxu0 0.0
    %288 = vmatpush1.msra.mxu0 0.0
    %289 = vmatprep.subr.mxu0 0.0
    %290 = vmatpush1.msra.mxu0 0.0
    %291 = vmatprep.subr.mxu0 0.0
    %292 = vmatpush1.msra.mxu0 0.0
    %293 = vmatprep.subr.mxu0 0.0
    %294 = vmatpush1.msra.mxu0 0.0
    %295 = vmatprep.subr.mxu0 0.0
    %296 = vmatpush1.msra.mxu0 0.0
    %297 = vmatprep.subr.mxu0 0.0
    %298 = vmatpush1.msra.mxu0 0.0
    %299 = vmatprep.subr.mxu0 0.0
    %300 = vmatpush1.msra.mxu0 0.0
    %301 = vmatprep.subr.mxu0 0.0
    %302 = vmatpush1.msra.mxu0 0.0
    %303 = vmatprep.subr.mxu0 0.0
    %304 = vmatpush1.msra.mxu0 0.0
    %305 = vmatprep.subr.mxu0 0.0
    %306 = vmatpush1.msra.mxu0 0.0
    %307 = vmatprep.subr.mxu0 0.0
    %308 = vmatpush1.msra.mxu0 0.0
    %309 = vmatprep.mubr.f32.mxu0 0.0
    %310 = vmatmul.mubr.f32.gmra.mrb[0].mxu0 %v243
    %v311 = vpop.f32.mrb[0].mxu0
    %v312 = vadd.f32 %v129, %v311
    %v313 = vpop.f32.mrb[0].mxu0
    %314 = vdwg.mxu0
    %v315 = vmax.f32 %v312, 0.0
    %v316 = vld [vmem:[%s3] sm:$0xf]
    %v317 = vld [vmem:[%s4] sm:$0x1]
    %v319 = vlaneseq
    %v320 = vshrl.u32 %v319, 7
    %v321 = vsub.s32 0, %v320
    %v322 = vrot.slane %v317, %v321
    %vm324 = vcmask 31744
    %v326 = vsel %vm324, %v315, 0
    %vm328 = vcmask 1043456
    %v330 = vsel %vm328, %v316, 0
    %332 = vmatprep.subr.mxu0 0.0
    %333 = vmatpush1.msra.mxu0 %v330
    %334 = vmatprep.subr.mxu0 0.0
    %335 = vmatpush1.msra.mxu0 0.0
    %336 = vmatprep.subr.mxu0 0.0
    %337 = vmatpush1.msra.mxu0 0.0
    %338 = vmatprep.subr.mxu0 0.0
    %339 = vmatpush1.msra.mxu0 0.0
    %340 = vmatprep.subr.mxu0 0.0
    %341 = vmatpush1.msra.mxu0 0.0
    %342 = vmatprep.subr.mxu0 0.0
    %343 = vmatpush1.msra.mxu0 0.0
    %344 = vmatprep.subr.mxu0 0.0
    %345 = vmatpush1.msra.mxu0 0.0
    %346 = vmatprep.subr.mxu0 0.0
    %347 = vmatpush1.msra.mxu0 0.0
    %348 = vmatprep.subr.mxu0 0.0
    %349 = vmatpush1.msra.mxu0 0.0
    %350 = vmatprep.subr.mxu0 0.0
    %351 = vmatpush1.msra.mxu0 0.0
    %352 = vmatprep.subr.mxu0 0.0
    %353 = vmatpush1.msra.mxu0 0.0
    %354 = vmatprep.subr.mxu0 0.0
    %355 = vmatpush1.msra.mxu0 0.0
    %356 = vmatprep.subr.mxu0 0.0
    %357 = vmatpush1.msra.mxu0 0.0
    %358 = vmatprep.subr.mxu0 0.0
    %359 = vmatpush1.msra.mxu0 0.0
    %360 = vmatprep.subr.mxu0 0.0
    %361 = vmatpush1.msra.mxu0 0.0
    %362 = vmatprep.subr.mxu0 0.0
    %363 = vmatpush1.msra.mxu0 0.0
    %364 = vmatprep.subr.mxu0 0.0
    %365 = vmatpush1.msra.mxu0 0.0
    %366 = vmatprep.subr.mxu0 0.0
    %367 = vmatpush1.msra.mxu0 0.0
    %368 = vmatprep.subr.mxu0 0.0
    %369 = vmatpush1.msra.mxu0 0.0
    %370 = vmatprep.subr.mxu0 0.0
    %371 = vmatpush1.msra.mxu0 0.0
    %372 = vmatprep.subr.mxu0 0.0
    %373 = vmatpush1.msra.mxu0 0.0
    %374 = vmatprep.subr.mxu0 0.0
    %375 = vmatpush1.msra.mxu0 0.0
    %376 = vmatprep.subr.mxu0 0.0
    %377 = vmatpush1.msra.mxu0 0.0
    %378 = vmatprep.subr.mxu0 0.0
    %379 = vmatpush1.msra.mxu0 0.0
    %380 = vmatprep.subr.mxu0 0.0
    %381 = vmatpush1.msra.mxu0 0.0
    %382 = vmatprep.subr.mxu0 0.0
    %383 = vmatpush1.msra.mxu0 0.0
    %384 = vmatprep.subr.mxu0 0.0
    %385 = vmatpush1.msra.mxu0 0.0
    %386 = vmatprep.subr.mxu0 0.0
    %387 = vmatpush1.msra.mxu0 0.0
    %388 = vmatprep.subr.mxu0 0.0
    %389 = vmatpush1.msra.mxu0 0.0
    %390 = vmatprep.subr.mxu0 0.0
    %391 = vmatpush1.msra.mxu0 0.0
    %392 = vmatprep.subr.mxu0 0.0
    %393 = vmatpush1.msra.mxu0 0.0
    %394 = vmatprep.subr.mxu0 0.0
    %395 = vmatpush1.msra.mxu0 0.0
    %396 = vmatprep.mubr.f32.mxu0 0.0
    %397 = vmatmul.mubr.f32.gmra.mrb[0].mxu0 %v326
    %v398 = vpop.f32.mrb[0].mxu0
    %v399 = vadd.f32 %v322, %v398
    %v400 = vpop.f32.mrb[0].mxu0
    %401 = vdwg.mxu0
    %v402 = vxor.u32 %v399, 2147483648
    %v403 = vmul.f32 %v402, 1.442695
    %v404 = vpow.pop %v403
    %v405 = vadd.f32 %v404, 1.0
    %v406 = vrcp.pop %v405
    %v407 = vmul.f32 1.0, %v406
    %v408 = vlaneseq
    %v409 = vshrl.u32 %v408, 7
    %v410 = vsub.s32 0, %v409
    %v411 = vrot.slane %v407, %v410
    %413 = vbcast.lane.b32.xlu0 %v411, 256
    %v414 = vpop.permute.xlu0 %413
    %s416 = sor.u32 256, 8
    %417 = vbcast.lane.b32.xlu0 %v411, %s416
    %v418 = vpop.permute.xlu0 %417
    %s420 = sor.u32 256, 16
    %421 = vbcast.lane.b32.xlu0 %v411, %s420
    %v422 = vpop.permute.xlu0 %421
    %s424 = sor.u32 256, 24
    %425 = vbcast.lane.b32.xlu0 %v411, %s424
    %v426 = vpop.permute.xlu0 %425
    %s428 = sor.u32 256, 32
    %429 = vbcast.lane.b32.xlu0 %v411, %s428
    %v430 = vpop.permute.xlu0 %429
    %s432 = sor.u32 256, 40
    %433 = vbcast.lane.b32.xlu0 %v411, %s432
    %v434 = vpop.permute.xlu0 %433
    %s436 = sor.u32 256, 48
    %437 = vbcast.lane.b32.xlu0 %v411, %s436
    %v438 = vpop.permute.xlu0 %437
    %s440 = sor.u32 256, 56
    %441 = vbcast.lane.b32.xlu0 %v411, %s440
    %v442 = vpop.permute.xlu0 %441
    %v443 = vlaneseq
    %v444 = vshrl.u32 %v443, 7
    %v445 = vsub.s32 1, %v444
    %v446 = vrot.slane %v407, %v445
    %448 = vbcast.lane.b32.xlu0 %v446, 256
    %v449 = vpop.permute.xlu0 %448
    %s451 = sor.u32 256, 8
    %452 = vbcast.lane.b32.xlu0 %v446, %s451
    %v453 = vpop.permute.xlu0 %452
    %s455 = sor.u32 256, 16
    %456 = vbcast.lane.b32.xlu0 %v446, %s455
    %v457 = vpop.permute.xlu0 %456
    %s459 = sor.u32 256, 24
    %460 = vbcast.lane.b32.xlu0 %v446, %s459
    %v461 = vpop.permute.xlu0 %460
    %s463 = sor.u32 256, 32
    %464 = vbcast.lane.b32.xlu0 %v446, %s463
    %v465 = vpop.permute.xlu0 %464
    %s467 = sor.u32 256, 40
    %468 = vbcast.lane.b32.xlu0 %v446, %s467
    %v469 = vpop.permute.xlu0 %468
    %s471 = sor.u32 256, 48
    %472 = vbcast.lane.b32.xlu0 %v446, %s471
    %v473 = vpop.permute.xlu0 %472
    %s475 = sor.u32 256, 56
    %476 = vbcast.lane.b32.xlu0 %v446, %s475
    %v477 = vpop.permute.xlu0 %476
    %v478 = vmul.f32 %v35, %v414
    %v479 = vmul.f32 %v36, %v418
    %v480 = vmul.f32 %v37, %v422
    %v481 = vmul.f32 %v38, %v426
    %v482 = vmul.f32 %v39, %v430
    %v483 = vmul.f32 %v40, %v434
    %v484 = vmul.f32 %v41, %v438
    %v485 = vmul.f32 %v42, %v442
    %v486 = vmul.f32 %v43, %v449
    %v487 = vmul.f32 %v44, %v453
    %v488 = vmul.f32 %v45, %v457
    %v489 = vmul.f32 %v46, %v461
    %v490 = vmul.f32 %v47, %v465
    %v491 = vmul.f32 %v48, %v469
    %v492 = vmul.f32 %v49, %v473
    %v493 = vmul.f32 %v50, %v477
    %494 = vst.msk [vmem:[#allocation5] sm:$0xff] %vm51, %v478
    %495 = vst.msk [vmem:[#allocation5 + $0x8] sm:$0xff] %vm51, %v479
    %496 = vst.msk [vmem:[#allocation5 + $0x10] sm:$0xff] %vm51, %v480
    %497 = vst.msk [vmem:[#allocation5 + $0x18] sm:$0xff] %vm51, %v481
    %498 = vst.msk [vmem:[#allocation5 + $0x20] sm:$0xff] %vm51, %v482
    %499 = vst.msk [vmem:[#allocation5 + $0x28] sm:$0xff] %vm51, %v483
    %500 = vst.msk [vmem:[#allocation5 + $0x30] sm:$0xff] %vm51, %v484
    %501 = vst.msk [vmem:[#allocation5 + $0x38] sm:$0xff] %vm51, %v485
    %502 = vst.msk [vmem:[#allocation5 + $0x40] sm:$0xff] %vm51, %v486
    %503 = vst.msk [vmem:[#allocation5 + $0x48] sm:$0xff] %vm51, %v487
    %504 = vst.msk [vmem:[#allocation5 + $0x50] sm:$0xff] %vm51, %v488
    %505 = vst.msk [vmem:[#allocation5 + $0x58] sm:$0xff] %vm51, %v489
    %506 = vst.msk [vmem:[#allocation5 + $0x60] sm:$0xff] %vm51, %v490
    %507 = vst.msk [vmem:[#allocation5 + $0x68] sm:$0xff] %vm51, %v491
    %508 = vst.msk [vmem:[#allocation5 + $0x70] sm:$0xff] %vm51, %v492
    %509 = vst.msk [vmem:[#allocation5 + $0x78] sm:$0xff] %vm51, %v493
    // Predicated region
    $region26: #{tpu_custom_call.1} parent=1 // pred_check
      _
    $region27: #{tpu_custom_call.1} parent=1 // pred_check_branch
      %511 = sbr.rel (0) target = $region29
    $region28: #{tpu_custom_call.1} parent=1 // pred_region
      %s513 = ssub.s32 2048, 2048
      %514 = vsyncadd [#allocation4], %s513
      %s515 = sshll.u32 [#allocation5], 4
      %s516 = int_to_ptr.vmem [resolvable:$true] %s515
      %521 = dma.vmem_to_hbm [thread:$0]  %s516, 2048, %s5, [#allocation4], 128, 128, 8
    $region29: #{tpu_custom_call.1} parent=1 // pred_fallthru
      _
    // Predicated region
    $region30: #{tpu_custom_call.1} parent=1 // pred_check
      _
    $region31: #{tpu_custom_call.1} parent=1 // pred_check_branch
      %523 = sbr.rel (0) target = $region33
    $region32: #{tpu_custom_call.1} parent=1 // pred_region
      %524 = dma.done [#allocation4], 2048
    $region33: #{tpu_custom_call.1} parent=1 // pred_fallthru
      _
    %525 = vsyncpa [#allocation3], 1
    %526 = vsyncpa [#allocation4], 1

</llo_original>
